<compile_context>
chip_gen: v6e
topology: v6e:2x2x1
jax: 0.10.0
libtpu: 0.0.40
codegen_flags: <defaults>
</compile_context>

<pallas_src>
from functools import partial

import numpy as np
import jax
import jax.numpy as jnp
from jax import lax
from jax.experimental import pallas as pl
from jax.experimental.pallas import tpu as pltpu


# -----------------------------------------------------------------------------
# Fused kernel: 1x1 conv (MXU) + reflection pad + depthwise 3x3 blur, stride 2.
# Writes the pre-BN tensor z and per-(batch, h-slab) channel sum / sum-of-squares.
# -----------------------------------------------------------------------------
def _conv_blur_kernel(xm_ref, xh_ref, w1_ref, k_ref, z_ref, s_ref, ss_ref):
    # xm_ref: (1, H_t, 2, Wo, Cin)  main slab; [:, :, 0] = even cols, [:, :, 1] = odd cols
    # xh_ref: (1, 1,   2, Wo, Cin)  one halo row (row above the slab; reflection already
    #                               resolved by its index_map)
    _, H_t, _, Wo, Cin = xm_ref.shape
    Cout = w1_ref.shape[1]
    Ho_t = H_t // 2
    Hp = H_t + 1

    # Stack the halo row on top of the slab (leading-dim concat; layout-free).
    xs = jnp.concatenate([xh_ref[...], xm_ref[...]], axis=1)[0]      # (Hp, 2, Wo, Cin)

    # 1x1 conv on the MXU (operands may be bf16; accumulation/result is f32).
    # NOTE: the conv bias is intentionally omitted -- it is a per-channel constant on z
    # and training-mode BatchNorm's mean subtraction cancels it exactly.
    x2 = xs.reshape(Hp * 2 * Wo, Cin)
    y2 = jnp.dot(x2, w1_ref[...], preferred_element_type=jnp.float32)
    y = y2.reshape(Hp, 2, Wo, Cout)

    even = y[:, 0]                                                   # cols 2j      (Hp, Wo, C)
    odd = y[:, 1]                                                    # cols 2j+1    (Hp, Wo, C)
    # Horizontal taps after ReflectionPad(1) at stride 2 (only the left reflect is used):
    #   dj=0 -> padded col 2j   -> odd col j-1 (j=0: reflected col 1 = odd col 0)
    #   dj=1 -> padded col 2j+1 -> even col j
    #   dj=2 -> padded col 2j+2 -> odd col j
    # (A pltpu.roll(odd, 1, axis=1) + column-0 fix-up is a possible XLU-slot variant;
    #  the two-slice sublane concat is kept because it is known to lower cleanly.)
    odd_shift = jnp.concatenate([odd[:, 0:1, :], odd[:, 0:Wo - 1, :]], axis=1)
    w_taps = (odd_shift, even, odd)

    # Vertical taps: local padded row for output row i and tap di is 2*i + di, where
    # row 0 of `xs`/`y` is the halo row.  Leading-dim slices + leading-only reshapes
    # (second/last dims untouched -> no relayout).
    kk = k_ref[...]                                                  # (9, Cout), row = di*3+dj
    acc = None
    for dj, wt in enumerate(w_taps):
        ta = wt[0:2 * Ho_t].reshape(Ho_t, 2, Wo, Cout)               # rows 2i   / 2i+1
        tb = wt[1:2 * Ho_t + 1].reshape(Ho_t, 2, Wo, Cout)           # rows 2i+1 / 2i+2
        h_taps = (ta[:, 0], ta[:, 1], tb[:, 1])                      # di = 0, 1, 2
        for di, tap in enumerate(h_taps):
            term = tap * kk[di * 3 + dj]
            acc = term if acc is None else acc + term                # (Ho_t, Wo, Cout) f32

    z_ref[...] = acc.astype(z_ref.dtype)[None]                       # (1, Ho_t, Wo, Cout)
    s_ref[...] = jnp.sum(acc, axis=(0, 1), keepdims=True)[None]      # (1, 1, 1, Cout) f32
    ss_ref[...] = jnp.sum(acc * acc, axis=(0, 1), keepdims=True)[None]


@partial(jax.jit, static_argnames=("eps", "compute_dtype"))
def transition_layer_pallas(x_nchw, w1_oc, b1, kernel_3x3_per_c, gamma, beta,
                            eps=1e-5, compute_dtype=jnp.bfloat16):
    # b1 is accepted for interface parity with the PyTorch module but is mathematically
    # irrelevant to the forward output (training-mode BN cancels per-channel constants).
    del b1
    N, Cin, H, W = x_nchw.shape
    Cout = w1_oc.shape[0]
    assert H % 2 == 0 and W % 2 == 0, "stride-2 kernel assumes even spatial dims"
    Ho, Wo = H // 2, W // 2

    x_item = jnp.dtype(compute_dtype).itemsize
    z_dtype = compute_dtype                      # bf16 z halves the dominant HBM stream
    z_item = jnp.dtype(z_dtype).itemsize

    # ---- per-generation VMEM-budgeted row-slab size (v5e/v6e 128 MiB, v7x 64 MiB) ----
    try:
        vmem_cap = int(pltpu.get_tpu_info().vmem_capacity_bytes)
    except Exception:
        vmem_cap = 64 * 2**20                    # conservative fallback (v7x per-core)

    def tile_vmem_bytes(h_t):
        hp, ho_t = h_t + 1, h_t // 2
        blocks = (2 * (h_t + 1) * 2 * Wo * Cin * x_item      # x slab + halo, double-buffered
                  + 2 * ho_t * Wo * Cout * z_item            # z slab, double-buffered
                  + 8 * Cout * 4                             # s / ss slabs
                  + 2 * (Cin + 9) * Cout * 4)                # weights (f32 upper bound)
        temps = (hp * 2 * Wo * Cin * x_item                  # xs
                 + hp * 2 * Wo * Cout * 4                    # y (f32 MXU result)
                 + 3 * hp * Wo * Cout * 4                    # even / odd / odd_shift
                 + 6 * ho_t * Wo * Cout * 4)                 # ta/tb views + acc + live term
        return blocks + temps

    budget = int(0.55 * vmem_cap)
    evens = [h for h in range(H, 0, -2) if H % h == 0]       # even divisors, descending
    fitting = [h for h in evens if tile_vmem_bytes(h) <= budget] or [evens[-1]]
    preferred = [h for h in fitting if H // h >= 2] or fitting   # keep >=2 slabs when free
    H_t = preferred[0]
    # v7x megacore balance: if the parallel grid product is odd, try a slightly smaller
    # (>= half-size) fitting slab that makes it even.
    if (N * (H // H_t)) % 2 == 1:
        for h in preferred:
            if h < H_t and (N * (H // h)) % 2 == 0 and 2 * h >= H_t:
                H_t = h
                break
    n_ht = H // H_t
    Ho_t = H_t // 2
    vmem_limit = int(min(int(0.8 * vmem_cap),
                         max(32 * 2**20, 2 * tile_vmem_bytes(H_t))))

    # ---- layout plumbing only (fused by XLA with the unavoidable NCHW->NHWC copy):
    # NHWC + de-interleave W into (even, odd) columns so in-kernel stride-2 column taps
    # are plain selects; cast the HBM stream to compute_dtype (bf16 by default).
    x_nhwc = jnp.transpose(x_nchw, (0, 2, 3, 1))
    xd = jnp.transpose(x_nhwc.reshape(N, H, Wo, 2, Cin), (0, 1, 3, 2, 4))
    xd = xd.astype(compute_dtype)                                     # (N, H, 2, Wo, Cin)

    w1 = jnp.asarray(w1_oc).astype(compute_dtype).T                   # (Cin, Cout)
    kfull = jnp.asarray(kernel_3x3_per_c, jnp.float32).reshape(Cout, 9).T   # (9, Cout)

    z, psum, psq = pl.pallas_call(
        _conv_blur_kernel,
        out_shape=(
            jax.ShapeDtypeStruct((N, Ho, Wo, Cout), z_dtype),
            jax.ShapeDtypeStruct((N, n_ht, 1, Cout), jnp.float32),
            jax.ShapeDtypeStruct((N, n_ht, 1, Cout), jnp.float32),
        ),
        grid=(N, n_ht),
        in_specs=[
            pl.BlockSpec((1, H_t, 2, Wo, Cin), lambda n, t: (n, t, 0, 0, 0)),
            # One-row halo: input row t*H_t - 1 just above the slab; for the first slab
            # the reflected top row is original row 1 (the only reflection ever needed
            # with stride 2 and even H).
            pl.BlockSpec((1, 1, 2, Wo, Cin),
                         lambda n, t: (n, jnp.maximum(t * H_t - 1, 1), 0, 0, 0)),
            pl.BlockSpec((Cin, Cout), lambda n, t: (0, 0)),
            pl.BlockSpec((9, Cout), lambda n, t: (0, 0)),
        ],
        out_specs=(
            pl.BlockSpec((1, Ho_t, Wo, Cout), lambda n, t: (n, t, 0, 0)),
            pl.BlockSpec((1, 1, 1, Cout), lambda n, t: (n, t, 0, 0)),
            pl.BlockSpec((1, 1, 1, Cout), lambda n, t: (n, t, 0, 0)),
        ),
        compiler_params=pltpu.CompilerParams(
            dimension_semantics=("parallel", "parallel"),
            vmem_limit_bytes=vmem_limit),
    )(xd, xd, w1, kfull)

    # BatchNorm batch statistics (training mode: biased variance).  The full-tensor
    # reduction happened in-kernel in f32; this is O(Cout) finalize glue.
    cnt = float(N * Ho * Wo)
    mean = jnp.sum(psum, axis=(0, 1, 2)) / cnt
    var = jnp.maximum(jnp.sum(psq, axis=(0, 1, 2)) / cnt - mean * mean, 0.0)
    scale = jnp.asarray(gamma, jnp.float32) * lax.rsqrt(var + eps)
    shift = jnp.asarray(beta, jnp.float32) - mean * scale
    # TODO(synk): BatchNorm2d running-mean/var buffer updates are a training-time side
    # effect and are not modeled (they do not affect this forward output).

    # BN FMA applied as plain jnp so XLA fuses it into the NHWC->NCHW output transpose
    # (no separate Pallas pass, no extra z-sized HBM round trip).
    out_nhwc = z.astype(jnp.float32) * scale + shift
    return jnp.transpose(out_nhwc, (0, 3, 1, 2))                      # NCHW


def transition_layer_ref(x_nchw, w1_oc, b1, kernel_3x3_per_c, gamma, beta, eps=1e-5):
    """Pure-JAX reference mirroring the PyTorch forward (training-mode BN, with bias)."""
    Cout = w1_oc.shape[0]
    y = jnp.einsum('oc,nchw->nohw', w1_oc, x_nchw) + b1[None, :, None, None]
    yp = jnp.pad(y, ((0, 0), (0, 0), (1, 1), (1, 1)), mode='reflect')
    k = kernel_3x3_per_c.reshape(Cout, 1, 3, 3)
    z = lax.conv_general_dilated(yp, k, window_strides=(2, 2), padding='VALID',
                                 feature_group_count=Cout,
                                 dimension_numbers=('NCHW', 'OIHW', 'NCHW'))
    mean = z.mean(axis=(0, 2, 3), keepdims=True)
    var = ((z - mean) ** 2).mean(axis=(0, 2, 3), keepdims=True)
    return ((z - mean) / jnp.sqrt(var + eps) * gamma[None, :, None, None]
            + beta[None, :, None, None])


if __name__ == "__main__":
    key = jax.random.PRNGKey(0)
    k1, k2, k3 = jax.random.split(key, 3)
    N, Cin, Cout, H, W = 2, 4, 8, 16, 16

    # deterministic synthetic parameters (shapes from TransitionLayer.__init__)
    x = jax.random.normal(k1, (N, Cin, H, W), jnp.float32)
    w1_oc = jax.random.normal(k2, (Cout, Cin), jnp.float32) * (1.0 / np.sqrt(Cin))
    b1 = jax.random.normal(k3, (Cout,), jnp.float32) * 0.1
    k2d = np.array([[1., 2., 1.], [2., 4., 2.], [1., 2., 1.]], np.float32)
    k2d /= k2d.sum()
    kernel_3x3 = jnp.asarray(np.tile(k2d[None], (Cout, 1, 1)))            # (Cout, 3, 3)
    gamma = jnp.asarray(np.linspace(0.5, 1.5, Cout), jnp.float32)
    beta = jnp.asarray(np.linspace(-0.2, 0.2, Cout), jnp.float32)

    ref = transition_layer_ref(x, w1_oc, b1, kernel_3x3, gamma, beta)

    # Strict f32 path (also proves the dropped conv bias is exactly cancelled by BN).
    out_f32 = jax.block_until_ready(
        transition_layer_pallas(x, w1_oc, b1, kernel_3x3, gamma, beta,
                                compute_dtype=jnp.float32))
    err_f32 = float(jnp.max(jnp.abs(out_f32 - ref)))
    if not np.isfinite(err_f32) or err_f32 > 2e-3:
        raise AssertionError(f"f32 path mismatch vs reference: max abs err = {err_f32}")

    # Default bf16-stream path (production default: half-width HBM x read and z write).
    out_bf16 = jax.block_until_ready(
        transition_layer_pallas(x, w1_oc, b1, kernel_3x3, gamma, beta))
    err_bf16 = float(jnp.max(jnp.abs(out_bf16 - ref)))
    if not np.isfinite(err_bf16) or err_bf16 > 5e-2:
        raise AssertionError(f"bf16 path mismatch vs reference: max abs err = {err_bf16}")

    print("KERNEL_OK")
</pallas_src>

<mosaic_0001>
module attributes {stable_mosaic.version = 11 : i64} {
  func.func @_conv_blur_kernel(%arg0: i32, %arg1: i32, %arg2: memref<1x8x2x8x4xf32, #tpu.memory_space<vmem>>, %arg3: memref<1x1x2x8x4xf32, #tpu.memory_space<vmem>>, %arg4: memref<4x8xf32, #tpu.memory_space<vmem>>, %arg5: memref<9x8xf32, #tpu.memory_space<vmem>>, %arg6: memref<1x4x8x8xf32, #tpu.memory_space<vmem>>, %arg7: memref<1x1x1x8xf32, #tpu.memory_space<vmem>>, %arg8: memref<1x1x1x8xf32, #tpu.memory_space<vmem>>) attributes {dimension_semantics = [#tpu.dimension_semantics<parallel>, #tpu.dimension_semantics<parallel>], iteration_bounds = array<i64: 2, 2>, scalar_prefetch = 0 : i64, scratch_operands = 0 : i64, tpu.core_type = #tpu.core_type<tc>, window_params = [{transform_indices = @transform_0, window_bounds = array<i64: 1, 8, 2, 8, 4>}, {transform_indices = @transform_1, window_bounds = array<i64: 1, 1, 2, 8, 4>}, {pipeline_mode = #tpu.pipeline_mode<synchronous>, transform_indices = @transform_2, window_bounds = array<i64: 4, 8>}, {pipeline_mode = #tpu.pipeline_mode<synchronous>, transform_indices = @transform_3, window_bounds = array<i64: 9, 8>}, {transform_indices = @transform_4, window_bounds = array<i64: 1, 4, 8, 8>}, {transform_indices = @transform_5, window_bounds = array<i64: 1, 1, 1, 8>}, {transform_indices = @transform_6, window_bounds = array<i64: 1, 1, 1, 8>}]} {
    %c0 = arith.constant 0 : index
    %c0_0 = arith.constant 0 : index
    %c0_1 = arith.constant 0 : index
    %c0_2 = arith.constant 0 : index
    %c0_3 = arith.constant 0 : index
    %0 = vector.load %arg3[%c0, %c0_0, %c0_1, %c0_2, %c0_3] : memref<1x1x2x8x4xf32, #tpu.memory_space<vmem>>, vector<1x1x2x8x4xf32>
    %c0_4 = arith.constant 0 : index
    %c0_5 = arith.constant 0 : index
    %c0_6 = arith.constant 0 : index
    %c0_7 = arith.constant 0 : index
    %c0_8 = arith.constant 0 : index
    %1 = vector.load %arg2[%c0_4, %c0_5, %c0_6, %c0_7, %c0_8] : memref<1x8x2x8x4xf32, #tpu.memory_space<vmem>>, vector<1x8x2x8x4xf32>
    %2 = tpu.concatenate %0, %1 in 1 : vector<1x1x2x8x4xf32>, vector<1x8x2x8x4xf32> -> vector<1x9x2x8x4xf32>
    %3 = vector.shape_cast %2 : vector<1x9x2x8x4xf32> to vector<9x2x8x4xf32>
    %4 = vector.shape_cast %3 : vector<9x2x8x4xf32> to vector<144x4xf32>
    %c0_9 = arith.constant 0 : index
    %c0_10 = arith.constant 0 : index
    %5 = vector.load %arg4[%c0_9, %c0_10] : memref<4x8xf32, #tpu.memory_space<vmem>>, vector<4x8xf32>
    %cst = arith.constant dense<0.000000e+00> : vector<144x8xf32>
    %6 = tpu.matmul %4, %5, %cst {dimension_numbers = #tpu.dot_dimension_numbers<[1], [0], [0], [1], [0, 0, 1, 1], [], []>} : vector<144x4xf32>, vector<4x8xf32>, vector<144x8xf32> -> vector<144x8xf32>
    %7 = vector.shape_cast %6 : vector<144x8xf32> to vector<9x2x8x8xf32>
    %8 = vector.extract_strided_slice %7 {offsets = [0, 0, 0, 0], sizes = [9, 1, 8, 8], strides = [1, 1, 1, 1]} : vector<9x2x8x8xf32> to vector<9x1x8x8xf32>
    %9 = vector.shape_cast %8 : vector<9x1x8x8xf32> to vector<9x8x8xf32>
    %10 = vector.extract_strided_slice %7 {offsets = [0, 1, 0, 0], sizes = [9, 1, 8, 8], strides = [1, 1, 1, 1]} : vector<9x2x8x8xf32> to vector<9x1x8x8xf32>
    %11 = vector.shape_cast %10 : vector<9x1x8x8xf32> to vector<9x8x8xf32>
    %12 = vector.extract_strided_slice %11 {offsets = [0, 0, 0], sizes = [9, 1, 8], strides = [1, 1, 1]} : vector<9x8x8xf32> to vector<9x1x8xf32>
    %13 = vector.extract_strided_slice %11 {offsets = [0, 0, 0], sizes = [9, 7, 8], strides = [1, 1, 1]} : vector<9x8x8xf32> to vector<9x7x8xf32>
    %14 = tpu.concatenate %12, %13 in 1 : vector<9x1x8xf32>, vector<9x7x8xf32> -> vector<9x8x8xf32>
    %c0_11 = arith.constant 0 : index
    %c0_12 = arith.constant 0 : index
    %15 = vector.load %arg5[%c0_11, %c0_12] : memref<9x8xf32, #tpu.memory_space<vmem>>, vector<9x8xf32>
    %16 = vector.extract_strided_slice %14 {offsets = [0, 0, 0], sizes = [8, 8, 8], strides = [1, 1, 1]} : vector<9x8x8xf32> to vector<8x8x8xf32>
    %17 = vector.shape_cast %16 : vector<8x8x8xf32> to vector<4x2x8x8xf32>
    %18 = vector.extract_strided_slice %14 {offsets = [1, 0, 0], sizes = [8, 8, 8], strides = [1, 1, 1]} : vector<9x8x8xf32> to vector<8x8x8xf32>
    %19 = vector.shape_cast %18 : vector<8x8x8xf32> to vector<4x2x8x8xf32>
    %20 = vector.extract_strided_slice %17 {offsets = [0, 0, 0, 0], sizes = [4, 1, 8, 8], strides = [1, 1, 1, 1]} : vector<4x2x8x8xf32> to vector<4x1x8x8xf32>
    %21 = vector.shape_cast %20 : vector<4x1x8x8xf32> to vector<4x8x8xf32>
    %22 = vector.extract_strided_slice %17 {offsets = [0, 1, 0, 0], sizes = [4, 1, 8, 8], strides = [1, 1, 1, 1]} : vector<4x2x8x8xf32> to vector<4x1x8x8xf32>
    %23 = vector.shape_cast %22 : vector<4x1x8x8xf32> to vector<4x8x8xf32>
    %24 = vector.extract_strided_slice %19 {offsets = [0, 1, 0, 0], sizes = [4, 1, 8, 8], strides = [1, 1, 1, 1]} : vector<4x2x8x8xf32> to vector<4x1x8x8xf32>
    %25 = vector.shape_cast %24 : vector<4x1x8x8xf32> to vector<4x8x8xf32>
    %26 = vector.extract_strided_slice %15 {offsets = [0, 0], sizes = [1, 8], strides = [1, 1]} : vector<9x8xf32> to vector<1x8xf32>
    %27 = vector.shape_cast %26 : vector<1x8xf32> to vector<8xf32>
    %28 = vector.shape_cast %27 : vector<8xf32> to vector<1x1x8xf32>
    %29 = vector.broadcast %28 : vector<1x1x8xf32> to vector<4x8x8xf32>
    %30 = arith.mulf %21, %29 : vector<4x8x8xf32>
    %31 = vector.extract_strided_slice %15 {offsets = [3, 0], sizes = [1, 8], strides = [1, 1]} : vector<9x8xf32> to vector<1x8xf32>
    %32 = vector.shape_cast %31 : vector<1x8xf32> to vector<8xf32>
    %33 = vector.shape_cast %32 : vector<8xf32> to vector<1x1x8xf32>
    %34 = vector.broadcast %33 : vector<1x1x8xf32> to vector<4x8x8xf32>
    %35 = arith.mulf %23, %34 : vector<4x8x8xf32>
    %36 = arith.addf %30, %35 : vector<4x8x8xf32>
    %37 = vector.extract_strided_slice %15 {offsets = [6, 0], sizes = [1, 8], strides = [1, 1]} : vector<9x8xf32> to vector<1x8xf32>
    %38 = vector.shape_cast %37 : vector<1x8xf32> to vector<8xf32>
    %39 = vector.shape_cast %38 : vector<8xf32> to vector<1x1x8xf32>
    %40 = vector.broadcast %39 : vector<1x1x8xf32> to vector<4x8x8xf32>
    %41 = arith.mulf %25, %40 : vector<4x8x8xf32>
    %42 = arith.addf %36, %41 : vector<4x8x8xf32>
    %43 = vector.extract_strided_slice %9 {offsets = [0, 0, 0], sizes = [8, 8, 8], strides = [1, 1, 1]} : vector<9x8x8xf32> to vector<8x8x8xf32>
    %44 = vector.shape_cast %43 : vector<8x8x8xf32> to vector<4x2x8x8xf32>
    %45 = vector.extract_strided_slice %9 {offsets = [1, 0, 0], sizes = [8, 8, 8], strides = [1, 1, 1]} : vector<9x8x8xf32> to vector<8x8x8xf32>
    %46 = vector.shape_cast %45 : vector<8x8x8xf32> to vector<4x2x8x8xf32>
    %47 = vector.extract_strided_slice %44 {offsets = [0, 0, 0, 0], sizes = [4, 1, 8, 8], strides = [1, 1, 1, 1]} : vector<4x2x8x8xf32> to vector<4x1x8x8xf32>
    %48 = vector.shape_cast %47 : vector<4x1x8x8xf32> to vector<4x8x8xf32>
    %49 = vector.extract_strided_slice %44 {offsets = [0, 1, 0, 0], sizes = [4, 1, 8, 8], strides = [1, 1, 1, 1]} : vector<4x2x8x8xf32> to vector<4x1x8x8xf32>
    %50 = vector.shape_cast %49 : vector<4x1x8x8xf32> to vector<4x8x8xf32>
    %51 = vector.extract_strided_slice %46 {offsets = [0, 1, 0, 0], sizes = [4, 1, 8, 8], strides = [1, 1, 1, 1]} : vector<4x2x8x8xf32> to vector<4x1x8x8xf32>
    %52 = vector.shape_cast %51 : vector<4x1x8x8xf32> to vector<4x8x8xf32>
    %53 = vector.extract_strided_slice %15 {offsets = [1, 0], sizes = [1, 8], strides = [1, 1]} : vector<9x8xf32> to vector<1x8xf32>
    %54 = vector.shape_cast %53 : vector<1x8xf32> to vector<8xf32>
    %55 = vector.shape_cast %54 : vector<8xf32> to vector<1x1x8xf32>
    %56 = vector.broadcast %55 : vector<1x1x8xf32> to vector<4x8x8xf32>
    %57 = arith.mulf %48, %56 : vector<4x8x8xf32>
    %58 = arith.addf %42, %57 : vector<4x8x8xf32>
    %59 = vector.extract_strided_slice %15 {offsets = [4, 0], sizes = [1, 8], strides = [1, 1]} : vector<9x8xf32> to vector<1x8xf32>
    %60 = vector.shape_cast %59 : vector<1x8xf32> to vector<8xf32>
    %61 = vector.shape_cast %60 : vector<8xf32> to vector<1x1x8xf32>
    %62 = vector.broadcast %61 : vector<1x1x8xf32> to vector<4x8x8xf32>
    %63 = arith.mulf %50, %62 : vector<4x8x8xf32>
    %64 = arith.addf %58, %63 : vector<4x8x8xf32>
    %65 = vector.extract_strided_slice %15 {offsets = [7, 0], sizes = [1, 8], strides = [1, 1]} : vector<9x8xf32> to vector<1x8xf32>
    %66 = vector.shape_cast %65 : vector<1x8xf32> to vector<8xf32>
    %67 = vector.shape_cast %66 : vector<8xf32> to vector<1x1x8xf32>
    %68 = vector.broadcast %67 : vector<1x1x8xf32> to vector<4x8x8xf32>
    %69 = arith.mulf %52, %68 : vector<4x8x8xf32>
    %70 = arith.addf %64, %69 : vector<4x8x8xf32>
    %71 = vector.extract_strided_slice %11 {offsets = [0, 0, 0], sizes = [8, 8, 8], strides = [1, 1, 1]} : vector<9x8x8xf32> to vector<8x8x8xf32>
    %72 = vector.shape_cast %71 : vector<8x8x8xf32> to vector<4x2x8x8xf32>
    %73 = vector.extract_strided_slice %11 {offsets = [1, 0, 0], sizes = [8, 8, 8], strides = [1, 1, 1]} : vector<9x8x8xf32> to vector<8x8x8xf32>
    %74 = vector.shape_cast %73 : vector<8x8x8xf32> to vector<4x2x8x8xf32>
    %75 = vector.extract_strided_slice %72 {offsets = [0, 0, 0, 0], sizes = [4, 1, 8, 8], strides = [1, 1, 1, 1]} : vector<4x2x8x8xf32> to vector<4x1x8x8xf32>
    %76 = vector.shape_cast %75 : vector<4x1x8x8xf32> to vector<4x8x8xf32>
    %77 = vector.extract_strided_slice %72 {offsets = [0, 1, 0, 0], sizes = [4, 1, 8, 8], strides = [1, 1, 1, 1]} : vector<4x2x8x8xf32> to vector<4x1x8x8xf32>
    %78 = vector.shape_cast %77 : vector<4x1x8x8xf32> to vector<4x8x8xf32>
    %79 = vector.extract_strided_slice %74 {offsets = [0, 1, 0, 0], sizes = [4, 1, 8, 8], strides = [1, 1, 1, 1]} : vector<4x2x8x8xf32> to vector<4x1x8x8xf32>
    %80 = vector.shape_cast %79 : vector<4x1x8x8xf32> to vector<4x8x8xf32>
    %81 = vector.extract_strided_slice %15 {offsets = [2, 0], sizes = [1, 8], strides = [1, 1]} : vector<9x8xf32> to vector<1x8xf32>
    %82 = vector.shape_cast %81 : vector<1x8xf32> to vector<8xf32>
    %83 = vector.shape_cast %82 : vector<8xf32> to vector<1x1x8xf32>
    %84 = vector.broadcast %83 : vector<1x1x8xf32> to vector<4x8x8xf32>
    %85 = arith.mulf %76, %84 : vector<4x8x8xf32>
    %86 = arith.addf %70, %85 : vector<4x8x8xf32>
    %87 = vector.extract_strided_slice %15 {offsets = [5, 0], sizes = [1, 8], strides = [1, 1]} : vector<9x8xf32> to vector<1x8xf32>
    %88 = vector.shape_cast %87 : vector<1x8xf32> to vector<8xf32>
    %89 = vector.shape_cast %88 : vector<8xf32> to vector<1x1x8xf32>
    %90 = vector.broadcast %89 : vector<1x1x8xf32> to vector<4x8x8xf32>
    %91 = arith.mulf %78, %90 : vector<4x8x8xf32>
    %92 = arith.addf %86, %91 : vector<4x8x8xf32>
    %93 = vector.extract_strided_slice %15 {offsets = [8, 0], sizes = [1, 8], strides = [1, 1]} : vector<9x8xf32> to vector<1x8xf32>
    %94 = vector.shape_cast %93 : vector<1x8xf32> to vector<8xf32>
    %95 = vector.shape_cast %94 : vector<8xf32> to vector<1x1x8xf32>
    %96 = vector.broadcast %95 : vector<1x1x8xf32> to vector<4x8x8xf32>
    %97 = arith.mulf %80, %96 : vector<4x8x8xf32>
    %98 = arith.addf %92, %97 : vector<4x8x8xf32>
    %99 = vector.shape_cast %98 : vector<4x8x8xf32> to vector<1x4x8x8xf32>
    %c0_13 = arith.constant 0 : index
    %c0_14 = arith.constant 0 : index
    %c0_15 = arith.constant 0 : index
    %c0_16 = arith.constant 0 : index
    %100 = vector.load %arg6[%c0_13, %c0_14, %c0_15, %c0_16] : memref<1x4x8x8xf32, #tpu.memory_space<vmem>>, vector<1x4x8x8xf32>
    tpu.vector_store %arg6[%c0_13, %c0_14, %c0_15, %c0_16], %99 {strides = array<i32>} : memref<1x4x8x8xf32, #tpu.memory_space<vmem>>, vector<1x4x8x8xf32>,
    %cst_17 = arith.constant dense<0.000000e+00> : vector<8xf32>
    %101 = vector.multi_reduction <add>, %98, %cst_17 [0, 1] : vector<4x8x8xf32> to vector<8xf32>
    %102 = vector.shape_cast %101 : vector<8xf32> to vector<1x1x8xf32>
    %103 = vector.shape_cast %102 : vector<1x1x8xf32> to vector<1x1x1x8xf32>
    %c0_18 = arith.constant 0 : index
    %c0_19 = arith.constant 0 : index
    %c0_20 = arith.constant 0 : index
    %c0_21 = arith.constant 0 : index
    %104 = vector.load %arg7[%c0_18, %c0_19, %c0_20, %c0_21] : memref<1x1x1x8xf32, #tpu.memory_space<vmem>>, vector<1x1x1x8xf32>
    tpu.vector_store %arg7[%c0_18, %c0_19, %c0_20, %c0_21], %103 {strides = array<i32>} : memref<1x1x1x8xf32, #tpu.memory_space<vmem>>, vector<1x1x1x8xf32>,
    %105 = arith.mulf %98, %98 : vector<4x8x8xf32>
    %cst_22 = arith.constant dense<0.000000e+00> : vector<8xf32>
    %106 = vector.multi_reduction <add>, %105, %cst_22 [0, 1] : vector<4x8x8xf32> to vector<8xf32>
    %107 = vector.shape_cast %106 : vector<8xf32> to vector<1x1x8xf32>
    %108 = vector.shape_cast %107 : vector<1x1x8xf32> to vector<1x1x1x8xf32>
    %c0_23 = arith.constant 0 : index
    %c0_24 = arith.constant 0 : index
    %c0_25 = arith.constant 0 : index
    %c0_26 = arith.constant 0 : index
    %109 = vector.load %arg8[%c0_23, %c0_24, %c0_25, %c0_26] : memref<1x1x1x8xf32, #tpu.memory_space<vmem>>, vector<1x1x1x8xf32>
    tpu.vector_store %arg8[%c0_23, %c0_24, %c0_25, %c0_26], %108 {strides = array<i32>} : memref<1x1x1x8xf32, #tpu.memory_space<vmem>>, vector<1x1x1x8xf32>,
    return
  }
  func.func @transform_0(%arg0: i32, %arg1: i32) -> (i32, i32, i32, i32, i32) {
    %c0_i32 = arith.constant 0 : i32
    %c0_i32_0 = arith.constant 0 : i32
    %c0_i32_1 = arith.constant 0 : i32
    %c0_i32_2 = arith.constant 0 : i32
    return %arg0, %arg1, %c0_i32, %c0_i32_0, %c0_i32_1 : i32, i32, i32, i32, i32
  }
  func.func @transform_1(%arg0: i32, %arg1: i32) -> (i32, i32, i32, i32, i32) {
    %c8_i32 = arith.constant 8 : i32
    %0 = arith.muli %arg1, %c8_i32 : i32
    %c1_i32 = arith.constant 1 : i32
    %1 = arith.subi %0, %c1_i32 : i32
    %c1_i32_0 = arith.constant 1 : i32
    %2 = arith.maxsi %1, %c1_i32_0 : i32
    %c0_i32 = arith.constant 0 : i32
    %c0_i32_1 = arith.constant 0 : i32
    %c0_i32_2 = arith.constant 0 : i32
    %c0_i32_3 = arith.constant 0 : i32
    return %arg0, %2, %c0_i32, %c0_i32_1, %c0_i32_2 : i32, i32, i32, i32, i32
  }
  func.func @transform_2(%arg0: i32, %arg1: i32) -> (i32, i32) {
    %c0_i32 = arith.constant 0 : i32
    %c0_i32_0 = arith.constant 0 : i32
    %c0_i32_1 = arith.constant 0 : i32
    return %c0_i32, %c0_i32_0 : i32, i32
  }
  func.func @transform_3(%arg0: i32, %arg1: i32) -> (i32, i32) {
    %c0_i32 = arith.constant 0 : i32
    %c0_i32_0 = arith.constant 0 : i32
    %c0_i32_1 = arith.constant 0 : i32
    return %c0_i32, %c0_i32_0 : i32, i32
  }
  func.func @transform_4(%arg0: i32, %arg1: i32) -> (i32, i32, i32, i32) {
    %c0_i32 = arith.constant 0 : i32
    %c0_i32_0 = arith.constant 0 : i32
    %c0_i32_1 = arith.constant 0 : i32
    return %arg0, %arg1, %c0_i32, %c0_i32_0 : i32, i32, i32, i32
  }
  func.func @transform_5(%arg0: i32, %arg1: i32) -> (i32, i32, i32, i32) {
    %c0_i32 = arith.constant 0 : i32
    %c0_i32_0 = arith.constant 0 : i32
    %c0_i32_1 = arith.constant 0 : i32
    return %arg0, %arg1, %c0_i32, %c0_i32_0 : i32, i32, i32, i32
  }
  func.func @transform_6(%arg0: i32, %arg1: i32) -> (i32, i32, i32, i32) {
    %c0_i32 = arith.constant 0 : i32
    %c0_i32_0 = arith.constant 0 : i32
    %c0_i32_1 = arith.constant 0 : i32
    return %arg0, %arg1, %c0_i32, %c0_i32_0 : i32, i32, i32, i32
  }
}

</mosaic_0001>

<llo_original>
// kernel: transition_layer_pallas.1
$region0: #{transition_layer_pallas.1}
  #allocation0 [shape = 'u32[]', space=smem, size = 0x4, offset = 0x4, fixed_abs, tag = 'smem constant byte address 0x4 - core index']
  #allocation1 [shape = 'u32[144,128]{1,0:T(1,128)}', space=vmem, size = 0x12000, scoped, tag = 'internal scratch']
  %s0 = inlined_call_operand.vmem [shape: f32[2,16,2,8,4], index: 0, kind: input, shape index: {}, may-alias: {0,1}]
  %s1 = inlined_call_operand.vmem [shape: f32[2,16,2,8,4], index: 1, kind: input, shape index: {}, may-alias: {0,1}]
  %s2 = inlined_call_operand.vmem [shape: f32[4,8], index: 2, kind: input, shape index: {}]
  %s3 = inlined_call_operand.vmem [shape: f32[9,8], index: 3, kind: input, shape index: {}]
  %s4 = inlined_call_operand.vmem [shape: f32[2,8,8,8], index: 4, kind: output, shape index: {0}]
  %s5 = inlined_call_operand.vmem [shape: f32[2,2,1,8], index: 5, kind: output, shape index: {1}]
  %s6 = inlined_call_operand.vmem [shape: f32[2,2,1,8], index: 6, kind: output, shape index: {2}]
  %7 = xla_tuple %s4, %s5, %s6
  %s8 = sld [smem:[#allocation0]]
  $region65: #{transition_layer_pallas.1} parent=0
    _
  %s10 = ssub.s32 1, %s8
  %s11 = scalar_select 0, %s10, %s8
  loop: start=0, step=1, limit=6
  $region2: #{transition_layer_pallas.1} parent=0 // loop_pre_header
    _
  $region3: #{transition_layer_pallas.1} parent=0 // loop_header
    %s13 = sphi 0, %s17
    %p14 = scmp.ge.s32.totalorder %s13, 6
    %s20 = sphi 0, %s32
    %s21 = sphi 0, %s28
    %s22 = sphi 0, %s20
    %s23 = sphi 0, %s21
    %s24 = sphi 0, %s22
    %s25 = sphi 0, %s23
    %s37 = sphi 0, %s39
    %s40 = sphi 0, %s37
    %s41 = sphi 0, %s40
    %s57 = sphi 0, %s41
    %s73 = sphi 0, %s75
    %s76 = sphi 0, %s73
    %s77 = sphi 0, %s76
    %s93 = sphi 0, %s77
    %s97 = sphi 0, %s97
    %s99 = sphi 0, %s97
    %s100 = sphi 0, %s99
    %s114 = sphi 0, %s100
    %s118 = sphi 0, %s118
    %s120 = sphi 0, %s118
    %s121 = sphi 0, %s120
    %s135 = sphi 0, %s121
    %s143 = sphi 0, %s145
    %s146 = sphi 0, %s143
    %s147 = sphi 0, %s146
    %s163 = sphi 0, %s147
    %s171 = sphi 0, %s173
    %s174 = sphi 0, %s171
    %s175 = sphi 0, %s174
    %s191 = sphi 0, %s175
    %s199 = sphi 0, %s201
    %s202 = sphi 0, %s199
    %s203 = sphi 0, %s202
    %s219 = sphi 0, %s203
  $region4: #{transition_layer_pallas.1} parent=0 // loop_header_branch
    %16 = sbr.rel (%p14) target = $region8
  $region5: #{transition_layer_pallas.1} parent=0 // loop_body
    %s18 = ssub.s32 %s13, 1
    %s19 = ssub.s32 %s13, 2
    %s26 = sadd.s32 1, %s21
    %p27 = scmp.ge.s32.totalorder %s26, 2
    %s28 = scalar_select %p27, 0, %s26
    %s29 = sadd.s32 1, %s20
    %s30 = scalar_select %p27, %s29, %s20
    %p31 = scmp.ge.s32.totalorder %s30, 2
    %s32 = scalar_select %p31, 0, %s30
    %s33 = ssub.s32 %s20, %s32
    %s34 = ssub.s32 %s21, %s28
    %s35 = sor.u32 %s33, %s34
    %p36 = scmp.eq.s32.totalorder %s35, 0
    %s38 = sadd.s32 %s37, 1
    %s39 = scalar_select %p36, %s37, %s38
    %p42 = pneg %p36
    %p43 = scmp.eq.s32.totalorder %s13, 3
    %p44 = por %p42, %p43
    %p45 = scmp.ne.s32.totalorder %s37, %s40
    %p46 = scmp.eq.s32.totalorder %s13, 0
    %p47 = por %p45, %p46
    %p48 = scmp.ne.s32.totalorder %s37, %s40
    %p49 = scmp.eq.s32.totalorder %s18, 3
    %p50 = por %p48, %p49
    %p51 = scmp.ne.s32.totalorder %s40, %s41
    %p52 = scmp.eq.s32.totalorder %s18, 0
    %p53 = por %p51, %p52
    %p54 = scmp.ne.s32.totalorder %s40, %s41
    %p55 = scmp.eq.s32.totalorder %s19, 3
    %p56 = por %p54, %p55
    %p58 = scmp.ne.s32.totalorder %s41, %s57
    %p59 = scmp.eq.s32.totalorder %s19, 0
    %p60 = por %p58, %p59
    %s61 = smul.u32 %s21, 8
    %s62 = ssub.s32 %s61, 1
    %p63 = scmp.gt.s32.totalorder %s62, 1
    %s64 = scalar_select %p63, %s62, 1
    %s65 = smul.u32 %s28, 8
    %s66 = ssub.s32 %s65, 1
    %p67 = scmp.gt.s32.totalorder %s66, 1
    %s68 = scalar_select %p67, %s66, 1
    %s69 = ssub.s32 %s20, %s32
    %s70 = ssub.s32 %s64, %s68
    %s71 = sor.u32 %s69, %s70
    %p72 = scmp.eq.s32.totalorder %s71, 0
    %s74 = sadd.s32 %s73, 1
    %s75 = scalar_select %p72, %s73, %s74
    %p78 = pneg %p72
    %p79 = scmp.eq.s32.totalorder %s13, 3
    %p80 = por %p78, %p79
    %p81 = scmp.ne.s32.totalorder %s73, %s76
    %p82 = scmp.eq.s32.totalorder %s13, 0
    %p83 = por %p81, %p82
    %p84 = scmp.ne.s32.totalorder %s73, %s76
    %p85 = scmp.eq.s32.totalorder %s18, 3
    %p86 = por %p84, %p85
    %p87 = scmp.ne.s32.totalorder %s76, %s77
    %p88 = scmp.eq.s32.totalorder %s18, 0
    %p89 = por %p87, %p88
    %p90 = scmp.ne.s32.totalorder %s76, %s77
    %p91 = scmp.eq.s32.totalorder %s19, 3
    %p92 = por %p90, %p91
    %p94 = scmp.ne.s32.totalorder %s77, %s93
    %p95 = scmp.eq.s32.totalorder %s19, 0
    %p96 = por %p94, %p95
    %s98 = sadd.s32 %s97, 1
    %p101 = scmp.eq.s32.totalorder %s13, 3
    %p102 = scmp.ne.s32.totalorder %s97, %s99
    %p103 = scmp.eq.s32.totalorder %s13, 0
    %p104 = por %p102, %p103
    %p105 = scmp.ne.s32.totalorder %s97, %s99
    %p106 = scmp.eq.s32.totalorder %s18, 3
    %p107 = por %p105, %p106
    %p108 = scmp.ne.s32.totalorder %s99, %s100
    %p109 = scmp.eq.s32.totalorder %s18, 0
    %p110 = por %p108, %p109
    %p111 = scmp.ne.s32.totalorder %s99, %s100
    %p112 = scmp.eq.s32.totalorder %s19, 3
    %p113 = por %p111, %p112
    %p115 = scmp.ne.s32.totalorder %s100, %s114
    %p116 = scmp.eq.s32.totalorder %s19, 0
    %p117 = por %p115, %p116
    %s119 = sadd.s32 %s118, 1
    %p122 = scmp.eq.s32.totalorder %s13, 3
    %p123 = scmp.ne.s32.totalorder %s118, %s120
    %p124 = scmp.eq.s32.totalorder %s13, 0
    %p125 = por %p123, %p124
    %p126 = scmp.ne.s32.totalorder %s118, %s120
    %p127 = scmp.eq.s32.totalorder %s18, 3
    %p128 = por %p126, %p127
    %p129 = scmp.ne.s32.totalorder %s120, %s121
    %p130 = scmp.eq.s32.totalorder %s18, 0
    %p131 = por %p129, %p130
    %p132 = scmp.ne.s32.totalorder %s120, %s121
    %p133 = scmp.eq.s32.totalorder %s19, 3
    %p134 = por %p132, %p133
    %p136 = scmp.ne.s32.totalorder %s121, %s135
    %p137 = scmp.eq.s32.totalorder %s19, 0
    %p138 = por %p136, %p137
    %s139 = ssub.s32 %s20, %s32
    %s140 = ssub.s32 %s21, %s28
    %s141 = sor.u32 %s139, %s140
    %p142 = scmp.eq.s32.totalorder %s141, 0
    %s144 = sadd.s32 %s143, 1
    %s145 = scalar_select %p142, %s143, %s144
    %p148 = pneg %p142
    %p149 = scmp.eq.s32.totalorder %s13, 3
    %p150 = por %p148, %p149
    %p151 = scmp.ne.s32.totalorder %s143, %s146
    %p152 = scmp.eq.s32.totalorder %s13, 0
    %p153 = por %p151, %p152
    %p154 = scmp.ne.s32.totalorder %s143, %s146
    %p155 = scmp.eq.s32.totalorder %s18, 3
    %p156 = por %p154, %p155
    %p157 = scmp.ne.s32.totalorder %s146, %s147
    %p158 = scmp.eq.s32.totalorder %s18, 0
    %p159 = por %p157, %p158
    %p160 = scmp.ne.s32.totalorder %s146, %s147
    %p161 = scmp.eq.s32.totalorder %s19, 3
    %p162 = por %p160, %p161
    %p164 = scmp.ne.s32.totalorder %s147, %s163
    %p165 = scmp.eq.s32.totalorder %s19, 0
    %p166 = por %p164, %p165
    %s167 = ssub.s32 %s20, %s32
    %s168 = ssub.s32 %s21, %s28
    %s169 = sor.u32 %s167, %s168
    %p170 = scmp.eq.s32.totalorder %s169, 0
    %s172 = sadd.s32 %s171, 1
    %s173 = scalar_select %p170, %s171, %s172
    %p176 = pneg %p170
    %p177 = scmp.eq.s32.totalorder %s13, 3
    %p178 = por %p176, %p177
    %p179 = scmp.ne.s32.totalorder %s171, %s174
    %p180 = scmp.eq.s32.totalorder %s13, 0
    %p181 = por %p179, %p180
    %p182 = scmp.ne.s32.totalorder %s171, %s174
    %p183 = scmp.eq.s32.totalorder %s18, 3
    %p184 = por %p182, %p183
    %p185 = scmp.ne.s32.totalorder %s174, %s175
    %p186 = scmp.eq.s32.totalorder %s18, 0
    %p187 = por %p185, %p186
    %p188 = scmp.ne.s32.totalorder %s174, %s175
    %p189 = scmp.eq.s32.totalorder %s19, 3
    %p190 = por %p188, %p189
    %p192 = scmp.ne.s32.totalorder %s175, %s191
    %p193 = scmp.eq.s32.totalorder %s19, 0
    %p194 = por %p192, %p193
    %s195 = ssub.s32 %s20, %s32
    %s196 = ssub.s32 %s21, %s28
    %s197 = sor.u32 %s195, %s196
    %p198 = scmp.eq.s32.totalorder %s197, 0
    %s200 = sadd.s32 %s199, 1
    %s201 = scalar_select %p198, %s199, %s200
    %p204 = pneg %p198
    %p205 = scmp.eq.s32.totalorder %s13, 3
    %p206 = por %p204, %p205
    %p207 = scmp.ne.s32.totalorder %s199, %s202
    %p208 = scmp.eq.s32.totalorder %s13, 0
    %p209 = por %p207, %p208
    %p210 = scmp.ne.s32.totalorder %s199, %s202
    %p211 = scmp.eq.s32.totalorder %s18, 3
    %p212 = por %p210, %p211
    %p213 = scmp.ne.s32.totalorder %s202, %s203
    %p214 = scmp.eq.s32.totalorder %s18, 0
    %p215 = por %p213, %p214
    %p216 = scmp.ne.s32.totalorder %s202, %s203
    %p217 = scmp.eq.s32.totalorder %s19, 3
    %p218 = por %p216, %p217
    %p220 = scmp.ne.s32.totalorder %s203, %s219
    %p221 = scmp.eq.s32.totalorder %s19, 0
    %p222 = por %p220, %p221
    %p223 = scmp.le.s32.totalorder 1, %s13
    %p224 = scmp.lt.s32.totalorder %s13, 5
    %p225 = pnand %p223, %p224
    %p226 = pneg %p225
    // Predicated region
    $region9: #{transition_layer_pallas.1} parent=5 // pred_check
      _
    $region10: #{transition_layer_pallas.1} parent=5 // pred_check_branch
      %228 = sbr.rel (%p225) target = $region12
    $region11: #{transition_layer_pallas.1} parent=5 // pred_region
      %s229 = ssub.s32 %s13, 1
      // Predicated region
      $region13: #{transition_layer_pallas.1} parent=11 // pred_check
        %p230 = pneg %p110
      $region14: #{transition_layer_pallas.1} parent=11 // pred_check_branch
        %232 = sbr.rel (%p230) target = $region16
      $region15: #{transition_layer_pallas.1} parent=11 // pred_region
        _
      $region16: #{transition_layer_pallas.1} parent=11 // pred_fallthru
        _
      // Predicated region
      $region17: #{transition_layer_pallas.1} parent=11 // pred_check
        %p233 = pneg %p131
      $region18: #{transition_layer_pallas.1} parent=11 // pred_check_branch
        %235 = sbr.rel (%p233) target = $region20
      $region19: #{transition_layer_pallas.1} parent=11 // pred_region
        _
      $region20: #{transition_layer_pallas.1} parent=11 // pred_fallthru
        _
    $region12: #{transition_layer_pallas.1} parent=5 // pred_fallthru
      _
    %p236 = scmp.lt.s32.totalorder %s13, 4
    // Predicated region
    $region21: #{transition_layer_pallas.1} parent=5 // pred_check
      %p237 = pneg %p236
    $region22: #{transition_layer_pallas.1} parent=5 // pred_check_branch
      %239 = sbr.rel (%p237) target = $region24
    $region23: #{transition_layer_pallas.1} parent=5 // pred_region
      // Predicated region
      $region25: #{transition_layer_pallas.1} parent=23 // pred_check
        %p240 = pneg %p47
      $region26: #{transition_layer_pallas.1} parent=23 // pred_check_branch
        %242 = sbr.rel (%p240) target = $region28
      $region27: #{transition_layer_pallas.1} parent=23 // pred_region
        %s243 = smul.u32 8, %s21
        %p244 = scmp.lt.s32.totalorder %s20, 1
        %s245 = scalar_select %p244, %s20, 1
        %p246 = scmp.lt.s32.totalorder %s243, 15
        %s247 = scalar_select %p246, %s243, 15
        %s248 = smul.addr %s247, 2
        %s249 = smul.addr %s245, 32
        %s250 = sadd.s32 %s248, %s249
        %s251 = smul.addr %s250, 8
        %s252 = scalar_lea.vmem %s0, %s251
        %s253 = smul.u32 8, %s21
      $region28: #{transition_layer_pallas.1} parent=23 // pred_fallthru
        _
      // Predicated region
      $region29: #{transition_layer_pallas.1} parent=23 // pred_check
        %p254 = pneg %p83
      $region30: #{transition_layer_pallas.1} parent=23 // pred_check_branch
        %256 = sbr.rel (%p254) target = $region32
      $region31: #{transition_layer_pallas.1} parent=23 // pred_region
        %s257 = smul.u32 %s21, 8
        %s258 = ssub.s32 %s257, 1
        %p259 = scmp.gt.s32.totalorder %s258, 1
        %s260 = scalar_select %p259, %s258, 1
        %p261 = scmp.lt.s32.totalorder %s20, 1
        %s262 = scalar_select %p261, %s20, 1
        %p263 = scmp.lt.s32.totalorder %s260, 15
        %s264 = scalar_select %p263, %s260, 15
        %s265 = smul.addr %s264, 2
        %s266 = smul.addr %s262, 32
        %s267 = sadd.s32 %s265, %s266
        %s268 = smul.addr %s267, 8
        %s269 = scalar_lea.vmem %s1, %s268
        %s270 = smul.u32 %s21, 8
        %s271 = ssub.s32 %s270, 1
        %p272 = scmp.gt.s32.totalorder %s271, 1
        %s273 = scalar_select %p272, %s271, 1
      $region32: #{transition_layer_pallas.1} parent=23 // pred_fallthru
        _
    $region24: #{transition_layer_pallas.1} parent=5 // pred_fallthru
      _
    %p274 = scmp.le.s32.totalorder 1, %s13
    %p275 = scmp.lt.s32.totalorder %s13, 5
    %p276 = pnand %p274, %p275
    %p277 = pneg %p276
    // Predicated region
    $region33: #{transition_layer_pallas.1} parent=5 // pred_check
      _
    $region34: #{transition_layer_pallas.1} parent=5 // pred_check_branch
      %279 = sbr.rel (%p276) target = $region36
    $region35: #{transition_layer_pallas.1} parent=5 // pred_region
      %s280 = ssub.s32 %s13, 1
      %s281 = smul.u32 8, %s23
      %p282 = scmp.lt.s32.totalorder %s22, 1
      %s283 = scalar_select %p282, %s22, 1
      %p284 = scmp.lt.s32.totalorder %s281, 15
      %s285 = scalar_select %p284, %s281, 15
      %s286 = smul.addr %s285, 2
      %s287 = smul.addr %s283, 32
      %s288 = sadd.s32 %s286, %s287
      %s289 = smul.addr %s288, 8
      %s290 = scalar_lea.vmem %s0, %s289
      %p291 = pneg %p53
      %p292 = pneg %p50
      %s293 = smul.u32 %s23, 8
      %s294 = ssub.s32 %s293, 1
      %p295 = scmp.gt.s32.totalorder %s294, 1
      %s296 = scalar_select %p295, %s294, 1
      %p297 = scmp.lt.s32.totalorder %s22, 1
      %s298 = scalar_select %p297, %s22, 1
      %p299 = scmp.lt.s32.totalorder %s296, 15
      %s300 = scalar_select %p299, %s296, 15
      %s301 = smul.addr %s300, 2
      %s302 = smul.addr %s298, 32
      %s303 = sadd.s32 %s301, %s302
      %s304 = smul.addr %s303, 8
      %s305 = scalar_lea.vmem %s1, %s304
      %p306 = pneg %p89
      %p307 = pneg %p86
      %p308 = pneg %p110
      %p309 = pneg %p107
      %p310 = pneg %p131
      %p311 = pneg %p128
      %p312 = pneg %p159
      %p313 = pneg %p156
      %s314 = smul.u32 4, %s23
      %p315 = scmp.lt.s32.totalorder %s22, 1
      %s316 = scalar_select %p315, %s22, 1
      %p317 = scmp.lt.s32.totalorder %s314, 7
      %s318 = scalar_select %p317, %s314, 7
      %s319 = smul.addr %s316, 8
      %s320 = sadd.s32 %s318, %s319
      %s321 = smul.addr %s320, 8
      %s322 = scalar_lea.vmem %s4, %s321
      %p323 = pneg %p187
      %p324 = pneg %p184
      %p325 = scmp.lt.s32.totalorder %s22, 1
      %s326 = scalar_select %p325, %s22, 1
      %p327 = scmp.lt.s32.totalorder %s23, 1
      %s328 = scalar_select %p327, %s23, 1
      %s329 = smul.addr %s326, 2
      %s330 = sadd.s32 %s328, %s329
      %s331 = scalar_lea.vmem %s5, %s330
      %p332 = pneg %p215
      %p333 = pneg %p212
      %p334 = scmp.lt.s32.totalorder %s22, 1
      %s335 = scalar_select %p334, %s22, 1
      %p336 = scmp.lt.s32.totalorder %s23, 1
      %s337 = scalar_select %p336, %s23, 1
      %s338 = smul.addr %s335, 2
      %s339 = sadd.s32 %s337, %s338
      %s340 = scalar_lea.vmem %s6, %s339
      %s341 = smul.u32 8, %s23
      %p342 = scmp.lt.s32.totalorder %s22, 1
      %s343 = scalar_select %p342, %s22, 1
      %p344 = scmp.lt.s32.totalorder %s341, 15
      %s345 = scalar_select %p344, %s341, 15
      %s346 = smul.addr %s345, 2
      %s347 = smul.addr %s343, 32
      %s348 = sadd.s32 %s346, %s347
      %s349 = smul.addr %s348, 8
      %s350 = scalar_lea.vmem %s0, %s349
      %s351 = smul.u32 8, %s23
      %s352 = smul.u32 %s23, 8
      %s353 = ssub.s32 %s352, 1
      %p354 = scmp.gt.s32.totalorder %s353, 1
      %s355 = scalar_select %p354, %s353, 1
      %p356 = scmp.lt.s32.totalorder %s22, 1
      %s357 = scalar_select %p356, %s22, 1
      %p358 = scmp.lt.s32.totalorder %s355, 15
      %s359 = scalar_select %p358, %s355, 15
      %s360 = smul.addr %s359, 2
      %s361 = smul.addr %s357, 32
      %s362 = sadd.s32 %s360, %s361
      %s363 = smul.addr %s362, 8
      %s364 = scalar_lea.vmem %s1, %s363
      %s365 = smul.u32 %s23, 8
      %s366 = ssub.s32 %s365, 1
      %p367 = scmp.gt.s32.totalorder %s366, 1
      %s368 = scalar_select %p367, %s366, 1
      %s369 = smul.u32 4, %s23
      %p370 = scmp.lt.s32.totalorder %s22, 1
      %s371 = scalar_select %p370, %s22, 1
      %p372 = scmp.lt.s32.totalorder %s369, 7
      %s373 = scalar_select %p372, %s369, 7
      %s374 = smul.addr %s371, 8
      %s375 = sadd.s32 %s373, %s374
      %s376 = smul.addr %s375, 8
      %s377 = scalar_lea.vmem %s4, %s376
      %s378 = smul.u32 4, %s23
      %p379 = scmp.lt.s32.totalorder %s22, 1
      %s380 = scalar_select %p379, %s22, 1
      %p381 = scmp.lt.s32.totalorder %s23, 1
      %s382 = scalar_select %p381, %s23, 1
      %s383 = smul.addr %s380, 2
      %s384 = sadd.s32 %s382, %s383
      %s385 = scalar_lea.vmem %s5, %s384
      %p386 = scmp.lt.s32.totalorder %s22, 1
      %s387 = scalar_select %p386, %s22, 1
      %p388 = scmp.lt.s32.totalorder %s23, 1
      %s389 = scalar_select %p388, %s23, 1
      %s390 = smul.addr %s387, 2
      %s391 = sadd.s32 %s389, %s390
      %s392 = scalar_lea.vmem %s6, %s391
      %v393 = vld [vmem:[%s364] sm:$0xff]
      %v394 = vld [vmem:[%s364 + $0x8] sm:$0xff]
      %v395 = vld [vmem:[%s350] sm:$0xff]
      %v396 = vld [vmem:[%s350 + $0x8] sm:$0xff]
      %v397 = vld [vmem:[%s350 + $0x10] sm:$0xff]
      %v398 = vld [vmem:[%s350 + $0x18] sm:$0xff]
      %v399 = vld [vmem:[%s350 + $0x20] sm:$0xff]
      %v400 = vld [vmem:[%s350 + $0x28] sm:$0xff]
      %v401 = vld [vmem:[%s350 + $0x30] sm:$0xff]
      %v402 = vld [vmem:[%s350 + $0x38] sm:$0xff]
      %v403 = vld [vmem:[%s350 + $0x40] sm:$0xff]
      %v404 = vld [vmem:[%s350 + $0x48] sm:$0xff]
      %v405 = vld [vmem:[%s350 + $0x50] sm:$0xff]
      %v406 = vld [vmem:[%s350 + $0x58] sm:$0xff]
      %v407 = vld [vmem:[%s350 + $0x60] sm:$0xff]
      %v408 = vld [vmem:[%s350 + $0x68] sm:$0xff]
      %v409 = vld [vmem:[%s350 + $0x70] sm:$0xff]
      %v410 = vld [vmem:[%s350 + $0x78] sm:$0xff]
      %v411 = vld [vmem:[%s2] sm:$0xf]
      %vm412 = vcmask 31744
      %v414 = vsel %vm412, %v393, 0
      %v417 = vsel %vm412, %v394, 0
      %v420 = vsel %vm412, %v395, 0
      %v423 = vsel %vm412, %v396, 0
      %v426 = vsel %vm412, %v397, 0
      %v429 = vsel %vm412, %v398, 0
      %v432 = vsel %vm412, %v399, 0
      %v435 = vsel %vm412, %v400, 0
      %v438 = vsel %vm412, %v401, 0
      %v441 = vsel %vm412, %v402, 0
      %v444 = vsel %vm412, %v403, 0
      %v447 = vsel %vm412, %v404, 0
      %v450 = vsel %vm412, %v405, 0
      %v453 = vsel %vm412, %v406, 0
      %v456 = vsel %vm412, %v407, 0
      %v459 = vsel %vm412, %v408, 0
      %v462 = vsel %vm412, %v409, 0
      %v465 = vsel %vm412, %v410, 0
      %vm467 = vcmask 1043456
      %v469 = vsel %vm467, %v411, 0
      %471 = vmatprep.subr.mxu0 0.0
      %472 = vmatpush1.msra.mxu0 0.0
      %473 = vmatprep.subr.mxu0 0.0
      %474 = vmatpush1.msra.mxu0 0.0
      %475 = vmatprep.subr.mxu0 0.0
      %476 = vmatpush1.msra.mxu0 0.0
      %477 = vmatprep.subr.mxu0 0.0
      %478 = vmatpush1.msra.mxu0 0.0
      %479 = vmatprep.subr.mxu0 0.0
      %480 = vmatpush1.msra.mxu0 0.0
      %481 = vmatprep.subr.mxu0 0.0
      %482 = vmatpush1.msra.mxu0 0.0
      %483 = vmatprep.subr.mxu0 0.0
      %484 = vmatpush1.msra.mxu0 0.0
      %485 = vmatprep.subr.mxu0 0.0
      %486 = vmatpush1.msra.mxu0 0.0
      %487 = vmatprep.subr.mxu0 0.0
      %488 = vmatpush1.msra.mxu0 0.0
      %489 = vmatprep.subr.mxu0 0.0
      %490 = vmatpush1.msra.mxu0 0.0
      %491 = vmatprep.subr.mxu0 0.0
      %492 = vmatpush1.msra.mxu0 0.0
      %493 = vmatprep.subr.mxu0 0.0
      %494 = vmatpush1.msra.mxu0 0.0
      %495 = vmatprep.subr.mxu0 0.0
      %496 = vmatpush1.msra.mxu0 0.0
      %497 = vmatprep.subr.mxu0 0.0
      %498 = vmatpush1.msra.mxu0 0.0
      %499 = vmatprep.subr.mxu0 0.0
      %500 = vmatpush1.msra.mxu0 0.0
      %501 = vmatprep.subr.mxu0 0.0
      %502 = vmatpush1.msra.mxu0 %v469
      %503 = vmatprep.subr.mxu0 0.0
      %504 = vmatpush2.msra.mxu0 0.0
      %505 = vmatprep.subr.mxu0 0.0
      %506 = vmatpush2.msra.mxu0 0.0
      %507 = vmatprep.subr.mxu0 0.0
      %508 = vmatpush2.msra.mxu0 0.0
      %509 = vmatprep.subr.mxu0 0.0
      %510 = vmatpush2.msra.mxu0 0.0
      %511 = vmatprep.subr.mxu0 0.0
      %512 = vmatpush2.msra.mxu0 0.0
      %513 = vmatprep.subr.mxu0 0.0
      %514 = vmatpush2.msra.mxu0 0.0
      %515 = vmatprep.subr.mxu0 0.0
      %516 = vmatpush2.msra.mxu0 0.0
      %517 = vmatprep.subr.mxu0 0.0
      %518 = vmatpush2.msra.mxu0 0.0
      %519 = vmatprep.subr.mxu0 0.0
      %520 = vmatpush2.msra.mxu0 0.0
      %521 = vmatprep.subr.mxu0 0.0
      %522 = vmatpush2.msra.mxu0 0.0
      %523 = vmatprep.subr.mxu0 0.0
      %524 = vmatpush2.msra.mxu0 0.0
      %525 = vmatprep.subr.mxu0 0.0
      %526 = vmatpush2.msra.mxu0 0.0
      %527 = vmatprep.subr.mxu0 0.0
      %528 = vmatpush2.msra.mxu0 0.0
      %529 = vmatprep.subr.mxu0 0.0
      %530 = vmatpush2.msra.mxu0 0.0
      %531 = vmatprep.subr.mxu0 0.0
      %532 = vmatpush2.msra.mxu0 0.0
      %533 = vmatprep.subr.mxu0 0.0
      %534 = vmatpush2.msra.mxu0 0.0
      %535 = vmatprep.mubr.f32.mxu0 0.0
      %536 = vmatmul.mubr.f32.gmra.mxu0 %v414
      %v537 = vpop.f32.mrf.mxu0
      %v538 = vadd.f32 0.0, %v537
      %v539 = vpop.f32.mrf.mxu0
      %540 = vmatprep.mubr.f32.mxu0 0.0
      %541 = vmatmul.mubr.f32.gmra.mxu0 %v417
      %v542 = vpop.f32.mrf.mxu0
      %v543 = vadd.f32 0.0, %v542
      %v544 = vpop.f32.mrf.mxu0
      %545 = vmatprep.mubr.f32.mxu0 0.0
      %546 = vmatmul.mubr.f32.gmra.mxu0 %v420
      %v547 = vpop.f32.mrf.mxu0
      %v548 = vadd.f32 0.0, %v547
      %v549 = vpop.f32.mrf.mxu0
      %550 = vmatprep.mubr.f32.mxu0 0.0
      %551 = vmatmul.mubr.f32.gmra.mxu0 %v423
      %v552 = vpop.f32.mrf.mxu0
      %v553 = vadd.f32 0.0, %v552
      %v554 = vpop.f32.mrf.mxu0
      %555 = vmatprep.mubr.f32.mxu0 0.0
      %556 = vmatmul.mubr.f32.gmra.mxu0 %v426
      %v557 = vpop.f32.mrf.mxu0
      %v558 = vadd.f32 0.0, %v557
      %v559 = vpop.f32.mrf.mxu0
      %560 = vmatprep.mubr.f32.mxu0 0.0
      %561 = vmatmul.mubr.f32.gmra.mxu0 %v429
      %v562 = vpop.f32.mrf.mxu0
      %v563 = vadd.f32 0.0, %v562
      %v564 = vpop.f32.mrf.mxu0
      %565 = vmatprep.mubr.f32.mxu0 0.0
      %566 = vmatmul.mubr.f32.gmra.mxu0 %v432
      %v567 = vpop.f32.mrf.mxu0
      %v568 = vadd.f32 0.0, %v567
      %v569 = vpop.f32.mrf.mxu0
      %570 = vmatprep.mubr.f32.mxu0 0.0
      %571 = vmatmul.mubr.f32.gmra.mxu0 %v435
      %v572 = vpop.f32.mrf.mxu0
      %v573 = vadd.f32 0.0, %v572
      %v574 = vpop.f32.mrf.mxu0
      %575 = vmatprep.mubr.f32.mxu0 0.0
      %576 = vmatmul.mubr.f32.gmra.mxu0 %v438
      %v577 = vpop.f32.mrf.mxu0
      %v578 = vadd.f32 0.0, %v577
      %v579 = vpop.f32.mrf.mxu0
      %580 = vmatprep.mubr.f32.mxu0 0.0
      %581 = vmatmul.mubr.f32.gmra.mxu0 %v441
      %v582 = vpop.f32.mrf.mxu0
      %v583 = vadd.f32 0.0, %v582
      %v584 = vpop.f32.mrf.mxu0
      %585 = vmatprep.mubr.f32.mxu0 0.0
      %586 = vmatmul.mubr.f32.gmra.mxu0 %v444
      %v587 = vpop.f32.mrf.mxu0
      %v588 = vadd.f32 0.0, %v587
      %v589 = vpop.f32.mrf.mxu0
      %590 = vmatprep.mubr.f32.mxu0 0.0
      %591 = vmatmul.mubr.f32.gmra.mxu0 %v447
      %v592 = vpop.f32.mrf.mxu0
      %v593 = vadd.f32 0.0, %v592
      %v594 = vpop.f32.mrf.mxu0
      %595 = vmatprep.mubr.f32.mxu0 0.0
      %596 = vmatmul.mubr.f32.gmra.mxu0 %v450
      %v597 = vpop.f32.mrf.mxu0
      %v598 = vadd.f32 0.0, %v597
      %v599 = vpop.f32.mrf.mxu0
      %600 = vmatprep.mubr.f32.mxu0 0.0
      %601 = vmatmul.mubr.f32.gmra.mxu0 %v453
      %v602 = vpop.f32.mrf.mxu0
      %v603 = vadd.f32 0.0, %v602
      %v604 = vpop.f32.mrf.mxu0
      %605 = vmatprep.mubr.f32.mxu0 0.0
      %606 = vmatmul.mubr.f32.gmra.mxu0 %v456
      %v607 = vpop.f32.mrf.mxu0
      %v608 = vadd.f32 0.0, %v607
      %v609 = vpop.f32.mrf.mxu0
      %610 = vmatprep.mubr.f32.mxu0 0.0
      %611 = vmatmul.mubr.f32.gmra.mxu0 %v459
      %v612 = vpop.f32.mrf.mxu0
      %v613 = vadd.f32 0.0, %v612
      %v614 = vpop.f32.mrf.mxu0
      %615 = vmatprep.mubr.f32.mxu0 0.0
      %616 = vmatmul.mubr.f32.gmra.mxu0 %v462
      %v617 = vpop.f32.mrf.mxu0
      %v618 = vadd.f32 0.0, %v617
      %v619 = vpop.f32.mrf.mxu0
      %620 = vmatprep.mubr.f32.mxu0 0.0
      %621 = vmatmul.mubr.f32.gmra.mxu0 %v465
      %v622 = vpop.f32.mrf.mxu0
      %v623 = vadd.f32 0.0, %v622
      %v624 = vpop.f32.mrf.mxu0
      %625 = vdwg.mxu0
      %v635 = vrot.slane %v543, 7
      %v636 = vrot.slane %v553, 7
      %v637 = vrot.slane %v563, 7
      %v638 = vrot.slane %v573, 7
      %v639 = vrot.slane %v583, 7
      %v640 = vrot.slane %v593, 7
      %v641 = vrot.slane %v603, 7
      %v642 = vrot.slane %v613, 7
      %v643 = vrot.slane %v623, 7
      %vm653 = vcmask 1040384
      %v654 = vsel %vm653, %v543, %v635
      %v655 = vsel %vm653, %v553, %v636
      %v656 = vsel %vm653, %v563, %v637
      %v657 = vsel %vm653, %v573, %v638
      %v658 = vsel %vm653, %v583, %v639
      %v659 = vsel %vm653, %v593, %v640
      %v660 = vsel %vm653, %v603, %v641
      %v661 = vsel %vm653, %v613, %v642
      %v662 = vsel %vm653, %v623, %v643
      %v663 = vld [vmem:[%s3] sm:$0xff]
      %v664 = vld [vmem:[%s3 + $0x8] sm:$0x1]
      %v665 = vlaneseq
      %v666 = vshrl.u32 %v665, 7
      %v667 = vsub.s32 0, %v666
      %v668 = vrot.slane %v663, %v667
      %v669 = vmul.f32 %v654, %v668
      %v670 = vmul.f32 %v656, %v668
      %v671 = vmul.f32 %v658, %v668
      %v672 = vmul.f32 %v660, %v668
      %v673 = vlaneseq
      %v674 = vshrl.u32 %v673, 7
      %v675 = vsub.s32 3, %v674
      %v676 = vrot.slane %v663, %v675
      %v677 = vmul.f32 %v655, %v676
      %v678 = vmul.f32 %v657, %v676
      %v679 = vmul.f32 %v659, %v676
      %v680 = vmul.f32 %v661, %v676
      %v681 = vadd.f32 %v669, %v677
      %v682 = vadd.f32 %v670, %v678
      %v683 = vadd.f32 %v671, %v679
      %v684 = vadd.f32 %v672, %v680
      %v685 = vlaneseq
      %v686 = vshrl.u32 %v685, 7
      %v687 = vsub.s32 6, %v686
      %v688 = vrot.slane %v663, %v687
      %v689 = vmul.f32 %v656, %v688
      %v690 = vmul.f32 %v658, %v688
      %v691 = vmul.f32 %v660, %v688
      %v692 = vmul.f32 %v662, %v688
      %v693 = vadd.f32 %v681, %v689
      %v694 = vadd.f32 %v682, %v690
      %v695 = vadd.f32 %v683, %v691
      %v696 = vadd.f32 %v684, %v692
      %v697 = vlaneseq
      %v698 = vshrl.u32 %v697, 7
      %v699 = vsub.s32 1, %v698
      %v700 = vrot.slane %v663, %v699
      %v701 = vmul.f32 %v538, %v700
      %v702 = vmul.f32 %v558, %v700
      %v703 = vmul.f32 %v578, %v700
      %v704 = vmul.f32 %v598, %v700
      %v705 = vadd.f32 %v693, %v701
      %v706 = vadd.f32 %v694, %v702
      %v707 = vadd.f32 %v695, %v703
      %v708 = vadd.f32 %v696, %v704
      %v709 = vlaneseq
      %v710 = vshrl.u32 %v709, 7
      %v711 = vsub.s32 4, %v710
      %v712 = vrot.slane %v663, %v711
      %v713 = vmul.f32 %v548, %v712
      %v714 = vmul.f32 %v568, %v712
      %v715 = vmul.f32 %v588, %v712
      %v716 = vmul.f32 %v608, %v712
      %v717 = vadd.f32 %v705, %v713
      %v718 = vadd.f32 %v706, %v714
      %v719 = vadd.f32 %v707, %v715
      %v720 = vadd.f32 %v708, %v716
      %v721 = vlaneseq
      %v722 = vshrl.u32 %v721, 7
      %v723 = vsub.s32 7, %v722
      %v724 = vrot.slane %v663, %v723
      %v725 = vmul.f32 %v558, %v724
      %v726 = vmul.f32 %v578, %v724
      %v727 = vmul.f32 %v598, %v724
      %v728 = vmul.f32 %v618, %v724
      %v729 = vadd.f32 %v717, %v725
      %v730 = vadd.f32 %v718, %v726
      %v731 = vadd.f32 %v719, %v727
      %v732 = vadd.f32 %v720, %v728
      %v733 = vlaneseq
      %v734 = vshrl.u32 %v733, 7
      %v735 = vsub.s32 2, %v734
      %v736 = vrot.slane %v663, %v735
      %v737 = vmul.f32 %v543, %v736
      %v738 = vmul.f32 %v563, %v736
      %v739 = vmul.f32 %v583, %v736
      %v740 = vmul.f32 %v603, %v736
      %v741 = vadd.f32 %v729, %v737
      %v742 = vadd.f32 %v730, %v738
      %v743 = vadd.f32 %v731, %v739
      %v744 = vadd.f32 %v732, %v740
      %v745 = vlaneseq
      %v746 = vshrl.u32 %v745, 7
      %v747 = vsub.s32 5, %v746
      %v748 = vrot.slane %v663, %v747
      %v749 = vmul.f32 %v553, %v748
      %v750 = vmul.f32 %v573, %v748
      %v751 = vmul.f32 %v593, %v748
      %v752 = vmul.f32 %v613, %v748
      %v753 = vadd.f32 %v741, %v749
      %v754 = vadd.f32 %v742, %v750
      %v755 = vadd.f32 %v743, %v751
      %v756 = vadd.f32 %v744, %v752
      %v757 = vlaneseq
      %v758 = vshrl.u32 %v757, 7
      %v759 = vsub.s32 0, %v758
      %v760 = vrot.slane %v664, %v759
      %v761 = vmul.f32 %v563, %v760
      %v762 = vmul.f32 %v583, %v760
      %v763 = vmul.f32 %v603, %v760
      %v764 = vmul.f32 %v623, %v760
      %v765 = vadd.f32 %v753, %v761
      %v766 = vadd.f32 %v754, %v762
      %v767 = vadd.f32 %v755, %v763
      %v768 = vadd.f32 %v756, %v764
      %vm769 = vcmask 64512
      %770 = vst.msk [vmem:[%s377] sm:$0xff] %vm769, %v765
      %771 = vst.msk [vmem:[%s377 + $0x8] sm:$0xff] %vm769, %v766
      %772 = vst.msk [vmem:[%s377 + $0x10] sm:$0xff] %vm769, %v767
      %773 = vst.msk [vmem:[%s377 + $0x18] sm:$0xff] %vm769, %v768
      %v774 = vsel %vm769, %v765, 0.0
      %v775 = vsel %vm769, %v766, 0.0
      %v776 = vadd.f32 %v774, %v775
      %v777 = vsel %vm769, %v767, 0.0
      %v778 = vadd.f32 %v776, %v777
      %v779 = vsel %vm769, %v768, 0.0
      %v780 = vadd.f32 %v778, %v779
      %v781 = vrot.slane %v780, 4
      %v782 = vadd.f32 %v780, %v781
      %v783 = vrot.slane %v782, 2
      %v784 = vadd.f32 %v782, %v783
      %v785 = vrot.slane %v784, 1
      %v786 = vadd.f32 %v784, %v785
      %vm787 = vcmask 57344
      %788 = vst.msk [vmem:[%s385] sm:$0x1] %vm787, %v786
      %v789 = vmul.f32 %v765, %v765
      %v790 = vmul.f32 %v766, %v766
      %v791 = vmul.f32 %v767, %v767
      %v792 = vmul.f32 %v768, %v768
      %v793 = vsel %vm769, %v789, 0.0
      %v794 = vsel %vm769, %v790, 0.0
      %v795 = vadd.f32 %v793, %v794
      %v796 = vsel %vm769, %v791, 0.0
      %v797 = vadd.f32 %v795, %v796
      %v798 = vsel %vm769, %v792, 0.0
      %v799 = vadd.f32 %v797, %v798
      %v800 = vrot.slane %v799, 4
      %v801 = vadd.f32 %v799, %v800
      %v802 = vrot.slane %v801, 2
      %v803 = vadd.f32 %v801, %v802
      %v804 = vrot.slane %v803, 1
      %v805 = vadd.f32 %v803, %v804
      %806 = vst.msk [vmem:[%s392] sm:$0x1] %vm787, %v805
      %s807 = smul.u32 4, %s23
      %p808 = scmp.lt.s32.totalorder %s22, 1
      %s809 = scalar_select %p808, %s22, 1
      %p810 = scmp.lt.s32.totalorder %s807, 7
      %s811 = scalar_select %p810, %s807, 7
      %s812 = smul.addr %s809, 8
      %s813 = sadd.s32 %s811, %s812
      %s814 = smul.addr %s813, 8
      %s815 = scalar_lea.vmem %s4, %s814
      %p816 = scmp.lt.s32.totalorder %s22, 1
      %s817 = scalar_select %p816, %s22, 1
      %p818 = scmp.lt.s32.totalorder %s23, 1
      %s819 = scalar_select %p818, %s23, 1
      %s820 = smul.addr %s817, 2
      %s821 = sadd.s32 %s819, %s820
      %s822 = scalar_lea.vmem %s5, %s821
      %p823 = scmp.lt.s32.totalorder %s22, 1
      %s824 = scalar_select %p823, %s22, 1
      %p825 = scmp.lt.s32.totalorder %s23, 1
      %s826 = scalar_select %p825, %s23, 1
      %s827 = smul.addr %s824, 2
      %s828 = sadd.s32 %s826, %s827
      %s829 = scalar_lea.vmem %s6, %s828
      // Predicated region
      $region37: #{transition_layer_pallas.1} parent=35 // pred_check
        %p830 = pneg %p156
      $region38: #{transition_layer_pallas.1} parent=35 // pred_check_branch
        %832 = sbr.rel (%p830) target = $region40
      $region39: #{transition_layer_pallas.1} parent=35 // pred_region
        %s833 = smul.u32 4, %s23
      $region40: #{transition_layer_pallas.1} parent=35 // pred_fallthru
        _
      // Predicated region
      $region41: #{transition_layer_pallas.1} parent=35 // pred_check
        %p834 = pneg %p184
      $region42: #{transition_layer_pallas.1} parent=35 // pred_check_branch
        %836 = sbr.rel (%p834) target = $region44
      $region43: #{transition_layer_pallas.1} parent=35 // pred_region
        _
      $region44: #{transition_layer_pallas.1} parent=35 // pred_fallthru
        _
      // Predicated region
      $region45: #{transition_layer_pallas.1} parent=35 // pred_check
        %p837 = pneg %p212
      $region46: #{transition_layer_pallas.1} parent=35 // pred_check_branch
        %839 = sbr.rel (%p837) target = $region48
      $region47: #{transition_layer_pallas.1} parent=35 // pred_region
        _
      $region48: #{transition_layer_pallas.1} parent=35 // pred_fallthru
        _
    $region36: #{transition_layer_pallas.1} parent=5 // pred_fallthru
      _
    %p840 = scmp.le.s32.totalorder 2, %s13
    // Predicated region
    $region49: #{transition_layer_pallas.1} parent=5 // pred_check
      %p841 = pneg %p840
    $region50: #{transition_layer_pallas.1} parent=5 // pred_check_branch
      %843 = sbr.rel (%p841) target = $region52
    $region51: #{transition_layer_pallas.1} parent=5 // pred_region
      %s844 = ssub.s32 %s13, 2
      // Predicated region
      $region53: #{transition_layer_pallas.1} parent=51 // pred_check
        %p845 = pneg %p162
      $region54: #{transition_layer_pallas.1} parent=51 // pred_check_branch
        %847 = sbr.rel (%p845) target = $region56
      $region55: #{transition_layer_pallas.1} parent=51 // pred_region
        %s848 = smul.u32 4, %s25
        %p849 = scmp.lt.s32.totalorder %s24, 1
        %s850 = scalar_select %p849, %s24, 1
        %p851 = scmp.lt.s32.totalorder %s848, 7
        %s852 = scalar_select %p851, %s848, 7
        %s853 = smul.addr %s850, 8
        %s854 = sadd.s32 %s852, %s853
        %s855 = smul.addr %s854, 8
        %s856 = scalar_lea.vmem %s4, %s855
      $region56: #{transition_layer_pallas.1} parent=51 // pred_fallthru
        _
      // Predicated region
      $region57: #{transition_layer_pallas.1} parent=51 // pred_check
        %p857 = pneg %p190
      $region58: #{transition_layer_pallas.1} parent=51 // pred_check_branch
        %859 = sbr.rel (%p857) target = $region60
      $region59: #{transition_layer_pallas.1} parent=51 // pred_region
        %p860 = scmp.lt.s32.totalorder %s24, 1
        %s861 = scalar_select %p860, %s24, 1
        %p862 = scmp.lt.s32.totalorder %s25, 1
        %s863 = scalar_select %p862, %s25, 1
        %s864 = smul.addr %s861, 2
        %s865 = sadd.s32 %s863, %s864
        %s866 = scalar_lea.vmem %s5, %s865
      $region60: #{transition_layer_pallas.1} parent=51 // pred_fallthru
        _
      // Predicated region
      $region61: #{transition_layer_pallas.1} parent=51 // pred_check
        %p867 = pneg %p218
      $region62: #{transition_layer_pallas.1} parent=51 // pred_check_branch
        %869 = sbr.rel (%p867) target = $region64
      $region63: #{transition_layer_pallas.1} parent=51 // pred_region
        %p870 = scmp.lt.s32.totalorder %s24, 1
        %s871 = scalar_select %p870, %s24, 1
        %p872 = scmp.lt.s32.totalorder %s25, 1
        %s873 = scalar_select %p872, %s25, 1
        %s874 = smul.addr %s871, 2
        %s875 = sadd.s32 %s873, %s874
        %s876 = scalar_lea.vmem %s6, %s875
      $region64: #{transition_layer_pallas.1} parent=51 // pred_fallthru
        _
    $region52: #{transition_layer_pallas.1} parent=5 // pred_fallthru
      _
  $region6: #{transition_layer_pallas.1} parent=0 // loop_footer
    %s17 = sadd.s32 1, %s13
  $region7: #{transition_layer_pallas.1} parent=0 // loop_footer_branch
    %12 = sbr.rel target = $region3
  $region8: #{transition_layer_pallas.1} parent=0 // loop_exit
    _

</llo_original>
